<compile_context>
chip_gen: v7x
topology: tpu7x:2x2x1
jax: 0.10.0
libtpu: 0.0.40
codegen_flags: <defaults>
</compile_context>

<pallas_src>
import math

import jax
import jax.numpy as jnp
from jax.experimental import pallas as pl
from jax.experimental.pallas import tpu as pltpu


def init_positional_encoding(d_model: int, max_seq_length: int,
                             dtype=jnp.float32) -> jnp.ndarray:
    """Deterministic sinusoidal table, identical to the PyTorch __init__.

    Stored directly in the activation dtype so the forward path never casts.
    """
    position = jnp.arange(max_seq_length, dtype=jnp.float32)[:, None]      # (L, 1)
    div_term = jnp.exp(
        jnp.arange(0, d_model, 2, dtype=jnp.float32)
        * -(math.log(10000.0) / d_model)
    )                                                                      # (D/2,)
    angles = position * div_term                                           # (L, D/2)
    pe = jnp.zeros((max_seq_length, d_model), dtype=jnp.float32)
    pe = pe.at[:, 0::2].set(jnp.sin(angles))
    pe = pe.at[:, 1::2].set(jnp.cos(angles))
    return pe.astype(dtype)                                                # (L, D)


def _pe_add_kernel(x_ref, pe_ref, o_ref):
    # x_ref / o_ref: (TR, TC) tile of the flattened (batch, seq*d_model) array
    # pe_ref:        (1, TC)  same columns, broadcast across the batch rows
    o_ref[...] = x_ref[...] + pe_ref[...]


def _sublane_pack(itemsize: int) -> int:
    # Rows packed per native sublane tile: 8 (f32), 16 (bf16), 32 (int8/fp8).
    return max(8, 32 // max(1, itemsize))


def _pick_row_tile(b: int, pack: int) -> int:
    """Dtype-aware row tile: multiple of the packed sublane count, up to 64."""
    if b <= pack or b % pack != 0:
        return b  # full extent (allowed by the (8,128) rule when == full dim)
    cap = max(pack, 64)
    t = min(b, (cap // pack) * pack)
    while b % t != 0:
        t -= pack
    return t


def _pick_col_tile(n_cols: int, tr: int, pack: int, itemsize: int,
                   vmem_budget_bytes: int = 20 << 20) -> int:
    """Largest multiple-of-128 divisor of n_cols fitting the VMEM budget.

    Budget = double-buffered x tile + out tile + pe tile, where the (1, TC)
    pe block is sublane-padded to (pack, TC).
    """
    assert n_cols % 128 == 0
    bytes_per_col = 2 * (2 * tr + pack) * itemsize
    max_cols = max(128, (vmem_budget_bytes // bytes_per_col) // 128 * 128)
    t = min(n_cols, max_cols)
    while n_cols % t != 0:
        t -= 128
    return t


def positional_encoding_forward(x: jnp.ndarray, pe: jnp.ndarray,
                                *, donate_x: bool = False) -> jnp.ndarray:
    """x: (B, S, D); pe: (max_seq_length, D). Returns x + pe[None, :S, :]."""
    B, S, D = x.shape
    max_len, d_model = pe.shape
    if S > max_len:
        raise ValueError(f"seq_len {S} exceeds max_seq_length {max_len}")
    if D != d_model:
        raise ValueError(f"d_model mismatch: x has {D}, pe has {d_model}")

    N = S * D
    itemsize = jnp.dtype(x.dtype).itemsize
    pack = _sublane_pack(itemsize)

    # Lane-dense flattened layout; pe table is already in the activation dtype
    # (init_positional_encoding), so this is a static slice + reshape only.
    x2 = x.reshape(B, N)
    pe2 = pe[:S, :].reshape(1, N)
    if pe2.dtype != x.dtype:
        pe2 = pe2.astype(x.dtype)  # fallback only; avoided when init'd in x.dtype

    # Rare branch: pad flattened columns to a multiple of 128 so tiling never
    # degenerates to one huge full-width block.
    pad = (-N) % 128
    if pad:
        x2 = jnp.pad(x2, ((0, 0), (0, pad)))
        pe2 = jnp.pad(pe2, ((0, 0), (0, pad)))
    Np = N + pad

    TR = _pick_row_tile(B, pack)
    TC = _pick_col_tile(Np, TR, pack, itemsize)

    # Ensure >=2 grid steps along a "parallel" axis when possible so both
    # v7x TensorCores get work.
    if (Np // TC) * (B // TR) == 1 and Np >= 256 and (Np // 2) % 128 == 0:
        TC = Np // 2

    grid = (Np // TC, B // TR)  # columns outermost -> pe tile reused across rows

    out2 = pl.pallas_call(
        _pe_add_kernel,
        out_shape=jax.ShapeDtypeStruct((B, Np), x.dtype),
        grid_spec=pltpu.PrefetchScalarGridSpec(
            num_scalar_prefetch=0,
            grid=grid,
            in_specs=[
                pl.BlockSpec((TR, TC), lambda c, r: (r, c)),   # x rows
                pl.BlockSpec((1, TC), lambda c, r: (0, c)),    # pe (batch-bcast)
            ],
            out_specs=pl.BlockSpec((TR, TC), lambda c, r: (r, c)),
        ),
        compiler_params=pltpu.CompilerParams(
            dimension_semantics=("parallel", "parallel"),
            vmem_limit_bytes=32 << 20,
        ),
        input_output_aliases=({0: 0} if donate_x else {}),
    )(x2, pe2)

    if pad:
        out2 = out2[:, :N]
    return out2.reshape(B, S, D)


if __name__ == "__main__":
    # Small shapes consistent with the module's forward: (batch, seq, d_model)
    batch, seq, d_model, max_seq_length = 2, 8, 32, 16

    key = jax.random.PRNGKey(0)
    x = jax.random.normal(key, (batch, seq, d_model), dtype=jnp.float32)

    # Buffer built once at init, already in the activation dtype.
    pe = init_positional_encoding(d_model, max_seq_length, dtype=x.dtype)

    out = positional_encoding_forward(x, pe)
    out = jax.block_until_ready(out)

    # Reference check in plain JAX
    ref = x + pe[None, :seq, :].astype(jnp.float32)
    assert out.shape == (batch, seq, d_model)
    assert jnp.allclose(out, ref, atol=1e-6), "mismatch vs reference"

    print("KERNEL_OK")
</pallas_src>

<mosaic_0001>
module attributes {stable_mosaic.version = 11 : i64} {
  func.func @_pe_add_kernel(%arg0: i32, %arg1: i32, %arg2: memref<2x128xf32, #tpu.memory_space<vmem>>, %arg3: memref<1x128xf32, #tpu.memory_space<vmem>>, %arg4: memref<2x128xf32, #tpu.memory_space<vmem>>) attributes {dimension_semantics = [#tpu.dimension_semantics<parallel>, #tpu.dimension_semantics<parallel>], iteration_bounds = array<i64: 2, 1>, scalar_prefetch = 0 : i64, scratch_operands = 0 : i64, tpu.core_type = #tpu.core_type<tc>, window_params = [{transform_indices = @transform_0, window_bounds = array<i64: 2, 128>}, {transform_indices = @transform_1, window_bounds = array<i64: 1, 128>}, {transform_indices = @transform_2, window_bounds = array<i64: 2, 128>}]} {
    %c0 = arith.constant 0 : index
    %c0_0 = arith.constant 0 : index
    %0 = vector.load %arg2[%c0, %c0_0] : memref<2x128xf32, #tpu.memory_space<vmem>>, vector<2x128xf32>
    %c0_1 = arith.constant 0 : index
    %c0_2 = arith.constant 0 : index
    %1 = vector.load %arg3[%c0_1, %c0_2] : memref<1x128xf32, #tpu.memory_space<vmem>>, vector<1x128xf32>
    %2 = vector.broadcast %1 : vector<1x128xf32> to vector<2x128xf32>
    %3 = arith.addf %0, %2 : vector<2x128xf32>
    %c0_3 = arith.constant 0 : index
    %c0_4 = arith.constant 0 : index
    %4 = vector.load %arg4[%c0_3, %c0_4] : memref<2x128xf32, #tpu.memory_space<vmem>>, vector<2x128xf32>
    tpu.vector_store %arg4[%c0_3, %c0_4], %3 {strides = array<i32>} : memref<2x128xf32, #tpu.memory_space<vmem>>, vector<2x128xf32>,
    return
  }
  func.func @transform_0(%arg0: i32, %arg1: i32) -> (i32, i32) {
    %c0_i32 = arith.constant 0 : i32
    return %arg1, %arg0 : i32, i32
  }
  func.func @transform_1(%arg0: i32, %arg1: i32) -> (i32, i32) {
    %c0_i32 = arith.constant 0 : i32
    %c0_i32_0 = arith.constant 0 : i32
    return %c0_i32, %arg0 : i32, i32
  }
  func.func @transform_2(%arg0: i32, %arg1: i32) -> (i32, i32) {
    %c0_i32 = arith.constant 0 : i32
    return %arg1, %arg0 : i32, i32
  }
}

</mosaic_0001>

<llo_original>
// kernel: tpu_custom_call.1
$region0: #{tpu_custom_call.1}
  #allocation0 [shape = 'u32[]', space=smem, size = 0x4, offset = 0x4, fixed_abs, tag = 'smem constant byte address 0x4 - core index']
  #allocation1 [shape = 'u32[144,128]{1,0:T(1,128)}', space=vmem, size = 0x12000, scoped, tag = 'internal scratch']
  %s0 = inlined_call_operand.hbm [shape: f32[2,256], index: 0, kind: input, shape index: {}]
  %s1 = inlined_call_operand.vmem [shape: f32[1,256], index: 1, kind: input, shape index: {}]
  %s2 = inlined_call_operand.hbm [shape: f32[2,256], index: 2, kind: output, shape index: {}]
  %s3 = sld [smem:[#allocation0]]
  $region45: #{tpu_custom_call.1} parent=0
    _
  %s5 = ssub.s32 1, %s3
  %s6 = scalar_select 0, %s5, %s3
  $region1: #{tpu_custom_call.1} parent=0
    #allocation2 [shape = 'u8[2048]{0}', space=vmem, size = 0x800, scoped, tag = 'input window, operand 0']
    #allocation3 [shape = 's32[2]{0}', space=sflag, size = 0x8, scoped, tag = 'scoped memory for tpu_custom_call.1']
    #allocation4 [shape = 's32[2]{0}', space=sflag, size = 0x8, scoped, tag = 'scoped memory for tpu_custom_call.1']
    #allocation5 [shape = 'u8[2048]{0}', space=vmem, size = 0x800, scoped, tag = 'output window, operand 0']
    %7 = vsyncpa [#allocation3], 0
    %s8 = scalar_lea.sflag [#allocation3], 1
    %9 = vsyncpa %s8, 0
    %10 = vsyncpa [#allocation4], 0
    %s11 = scalar_lea.sflag [#allocation4], 1
    %12 = vsyncpa %s11, 0
    loop: start=0, step=1, limit=4
    $region2: #{tpu_custom_call.1} parent=1 // loop_pre_header
      _
    $region3: #{tpu_custom_call.1} parent=1 // loop_header
      %s14 = sphi 0, %s18
      %p15 = scmp.ge.s32.totalorder %s14, 4
      %s21 = sphi 0, %s33
      %s22 = sphi 0, %s29
      %s23 = sphi 0, %s21
      %s24 = sphi 0, %s22
      %s25 = sphi 0, %s23
      %s26 = sphi 0, %s24
      %s38 = sphi 0, %s40
      %s41 = sphi 0, %s38
      %s42 = sphi 0, %s41
      %s58 = sphi 0, %s42
      %s64 = sphi 0, %s66
      %s67 = sphi 0, %s64
      %s68 = sphi 0, %s67
      %s84 = sphi 0, %s68
      %s92 = sphi 0, %s94
      %s95 = sphi 0, %s92
      %s96 = sphi 0, %s95
      %s112 = sphi 0, %s96
    $region4: #{tpu_custom_call.1} parent=1 // loop_header_branch
      %17 = sbr.rel (%p15) target = $region8
    $region5: #{tpu_custom_call.1} parent=1 // loop_body
      %s19 = ssub.s32 %s14, 1
      %s20 = ssub.s32 %s14, 2
      %s27 = sadd.s32 1, %s22
      %p28 = scmp.ge.s32.totalorder %s27, 1
      %s29 = scalar_select %p28, 0, %s27
      %s30 = sadd.s32 1, %s21
      %s31 = scalar_select %p28, %s30, %s21
      %p32 = scmp.ge.s32.totalorder %s31, 2
      %s33 = scalar_select %p32, 0, %s31
      %s34 = ssub.s32 %s22, %s29
      %s35 = ssub.s32 %s21, %s33
      %s36 = sor.u32 %s34, %s35
      %p37 = scmp.eq.s32.totalorder %s36, 0
      %s39 = sadd.s32 %s38, 1
      %s40 = scalar_select %p37, %s38, %s39
      %p43 = pneg %p37
      %p44 = scmp.eq.s32.totalorder %s14, 1
      %p45 = por %p43, %p44
      %p46 = scmp.ne.s32.totalorder %s38, %s41
      %p47 = scmp.eq.s32.totalorder %s14, 0
      %p48 = por %p46, %p47
      %p49 = scmp.ne.s32.totalorder %s38, %s41
      %p50 = scmp.eq.s32.totalorder %s19, 1
      %p51 = por %p49, %p50
      %p52 = scmp.ne.s32.totalorder %s41, %s42
      %p53 = scmp.eq.s32.totalorder %s19, 0
      %p54 = por %p52, %p53
      %p55 = scmp.ne.s32.totalorder %s41, %s42
      %p56 = scmp.eq.s32.totalorder %s20, 1
      %p57 = por %p55, %p56
      %p59 = scmp.ne.s32.totalorder %s42, %s58
      %p60 = scmp.eq.s32.totalorder %s20, 0
      %p61 = por %p59, %p60
      %s62 = ssub.s32 %s21, %s33
      %p63 = scmp.eq.s32.totalorder %s62, 0
      %s65 = sadd.s32 %s64, 1
      %s66 = scalar_select %p63, %s64, %s65
      %p69 = pneg %p63
      %p70 = scmp.eq.s32.totalorder %s14, 1
      %p71 = por %p69, %p70
      %p72 = scmp.ne.s32.totalorder %s64, %s67
      %p73 = scmp.eq.s32.totalorder %s14, 0
      %p74 = por %p72, %p73
      %p75 = scmp.ne.s32.totalorder %s64, %s67
      %p76 = scmp.eq.s32.totalorder %s19, 1
      %p77 = por %p75, %p76
      %p78 = scmp.ne.s32.totalorder %s67, %s68
      %p79 = scmp.eq.s32.totalorder %s19, 0
      %p80 = por %p78, %p79
      %p81 = scmp.ne.s32.totalorder %s67, %s68
      %p82 = scmp.eq.s32.totalorder %s20, 1
      %p83 = por %p81, %p82
      %p85 = scmp.ne.s32.totalorder %s68, %s84
      %p86 = scmp.eq.s32.totalorder %s20, 0
      %p87 = por %p85, %p86
      %s88 = ssub.s32 %s22, %s29
      %s89 = ssub.s32 %s21, %s33
      %s90 = sor.u32 %s88, %s89
      %p91 = scmp.eq.s32.totalorder %s90, 0
      %s93 = sadd.s32 %s92, 1
      %s94 = scalar_select %p91, %s92, %s93
      %p97 = pneg %p91
      %p98 = scmp.eq.s32.totalorder %s14, 1
      %p99 = por %p97, %p98
      %p100 = scmp.ne.s32.totalorder %s92, %s95
      %p101 = scmp.eq.s32.totalorder %s14, 0
      %p102 = por %p100, %p101
      %p103 = scmp.ne.s32.totalorder %s92, %s95
      %p104 = scmp.eq.s32.totalorder %s19, 1
      %p105 = por %p103, %p104
      %p106 = scmp.ne.s32.totalorder %s95, %s96
      %p107 = scmp.eq.s32.totalorder %s19, 0
      %p108 = por %p106, %p107
      %p109 = scmp.ne.s32.totalorder %s95, %s96
      %p110 = scmp.eq.s32.totalorder %s20, 1
      %p111 = por %p109, %p110
      %p113 = scmp.ne.s32.totalorder %s96, %s112
      %p114 = scmp.eq.s32.totalorder %s20, 0
      %p115 = por %p113, %p114
      %p116 = scmp.le.s32.totalorder 1, %s14
      %p117 = scmp.lt.s32.totalorder %s14, 3
      %p118 = pnand %p116, %p117
      %p119 = pneg %p118
      // Predicated region
      $region9: #{tpu_custom_call.1} parent=5 // pred_check
        _
      $region10: #{tpu_custom_call.1} parent=5 // pred_check_branch
        %121 = sbr.rel (%p118) target = $region12
      $region11: #{tpu_custom_call.1} parent=5 // pred_region
        %s122 = ssub.s32 %s14, 1
      $region12: #{tpu_custom_call.1} parent=5 // pred_fallthru
        _
      %p123 = scmp.lt.s32.totalorder %s14, 2
      // Predicated region
      $region13: #{tpu_custom_call.1} parent=5 // pred_check
        %p124 = pneg %p123
      $region14: #{tpu_custom_call.1} parent=5 // pred_check_branch
        %126 = sbr.rel (%p124) target = $region16
      $region15: #{tpu_custom_call.1} parent=5 // pred_region
        // Predicated region
        $region17: #{tpu_custom_call.1} parent=15 // pred_check
          %p127 = pneg %p48
        $region18: #{tpu_custom_call.1} parent=15 // pred_check_branch
          %129 = sbr.rel (%p127) target = $region20
        $region19: #{tpu_custom_call.1} parent=15 // pred_region
          %s130 = sand.u32 %s38, 1
          %s131 = scalar_lea.sflag [#allocation3], %s130
          %s132 = sand.u32 %s38, 1
          %s133 = smul.addr %s132, 2
          %s134 = scalar_lea.vmem [#allocation2], %s133
          %s136 = ssub.s32 32, 32
          %137 = vsyncadd %s131, %s136
          %s138 = smul.addr %s22, 2
          %s139 = sadd.s32 %s21, %s138
          %s140 = smul.addr %s139, 32
          %s141 = scalar_lea.hbm %s0, %s140
          %s143 = sshll.u32 %s134, 4
          %s144 = int_to_ptr.vmem [resolvable:$true] %s143
          %146 = dma.hbm_to_vmem [thread:$0]  %s141, 32, %s144, %s131
        $region20: #{tpu_custom_call.1} parent=15 // pred_fallthru
          _
        // Predicated region
        $region21: #{tpu_custom_call.1} parent=15 // pred_check
          %p147 = pneg %p74
        $region22: #{tpu_custom_call.1} parent=15 // pred_check_branch
          %149 = sbr.rel (%p147) target = $region24
        $region23: #{tpu_custom_call.1} parent=15 // pred_region
          %p150 = scmp.lt.s32.totalorder %s21, 1
          %s151 = scalar_select %p150, %s21, 1
          %s152 = scalar_lea.vmem %s1, %s151
        $region24: #{tpu_custom_call.1} parent=15 // pred_fallthru
          _
      $region16: #{tpu_custom_call.1} parent=5 // pred_fallthru
        _
      %p153 = scmp.le.s32.totalorder 1, %s14
      %p154 = scmp.lt.s32.totalorder %s14, 3
      %p155 = pnand %p153, %p154
      %p156 = pneg %p155
      // Predicated region
      $region25: #{tpu_custom_call.1} parent=5 // pred_check
        _
      $region26: #{tpu_custom_call.1} parent=5 // pred_check_branch
        %158 = sbr.rel (%p155) target = $region28
      $region27: #{tpu_custom_call.1} parent=5 // pred_region
        %s159 = ssub.s32 %s14, 1
        %s160 = sand.u32 %s41, 1
        %s161 = scalar_lea.sflag [#allocation3], %s160
        %s162 = sand.u32 %s41, 1
        %s163 = smul.addr %s162, 2
        %s164 = scalar_lea.vmem [#allocation2], %s163
        // Predicated region
        $region29: #{tpu_custom_call.1} parent=27 // pred_check
          %p165 = pneg %p54
        $region30: #{tpu_custom_call.1} parent=27 // pred_check_branch
          %167 = sbr.rel (%p165) target = $region32
        $region31: #{tpu_custom_call.1} parent=27 // pred_region
          %168 = dma.done %s161, 32
        $region32: #{tpu_custom_call.1} parent=27 // pred_fallthru
          _
        %s169 = sand.u32 %s41, 1
        %s170 = scalar_lea.sflag [#allocation3], %s169
        %s171 = sand.u32 %s41, 1
        %s172 = smul.addr %s171, 2
        %s173 = scalar_lea.vmem [#allocation2], %s172
        %p174 = pneg %p54
        %p175 = pneg %p51
        %p176 = scmp.lt.s32.totalorder %s23, 1
        %s177 = scalar_select %p176, %s23, 1
        %s178 = scalar_lea.vmem %s1, %s177
        %p179 = pneg %p80
        %p180 = pneg %p77
        %p181 = pneg %p108
        %p182 = pneg %p105
        %s183 = sand.u32 %s95, 1
        %s184 = scalar_lea.sflag [#allocation4], %s183
        %s185 = sand.u32 %s95, 1
        %s186 = smul.addr %s185, 2
        %s187 = scalar_lea.vmem [#allocation5], %s186
        %p188 = scmp.lt.s32.totalorder %s23, 1
        %s189 = scalar_select %p188, %s23, 1
        %s190 = scalar_lea.vmem %s1, %s189
        %v191 = vld [vmem:[%s164] sm:$0x3]
        %v192 = vld [vmem:[%s190] sm:$0x1]
        %v194 = vlaneseq
        %v195 = vshrl.u32 %v194, 7
        %v196 = vsub.s32 0, %v195
        %v197 = vrot.slane %v192, %v196
        %v199 = vadd.f32 %v191, %v197
        %200 = vst [vmem:[%s187] sm:$0x3] %v199
        %s201 = sand.u32 %s95, 1
        %s202 = scalar_lea.sflag [#allocation4], %s201
        %s203 = sand.u32 %s95, 1
        %s204 = smul.addr %s203, 2
        %s205 = scalar_lea.vmem [#allocation5], %s204
        // Predicated region
        $region33: #{tpu_custom_call.1} parent=27 // pred_check
          %p206 = pneg %p105
        $region34: #{tpu_custom_call.1} parent=27 // pred_check_branch
          %208 = sbr.rel (%p206) target = $region36
        $region35: #{tpu_custom_call.1} parent=27 // pred_region
          %s210 = ssub.s32 32, 32
          %211 = vsyncadd %s202, %s210
          %s212 = smul.addr %s24, 2
          %s213 = sadd.s32 %s23, %s212
          %s214 = smul.addr %s213, 32
          %s215 = scalar_lea.hbm %s2, %s214
          %s217 = sshll.u32 %s205, 4
          %s218 = int_to_ptr.vmem [resolvable:$true] %s217
          %220 = dma.vmem_to_hbm [thread:$0]  %s218, 32, %s215, %s202
        $region36: #{tpu_custom_call.1} parent=27 // pred_fallthru
          _
      $region28: #{tpu_custom_call.1} parent=5 // pred_fallthru
        _
      %p221 = scmp.le.s32.totalorder 2, %s14
      // Predicated region
      $region37: #{tpu_custom_call.1} parent=5 // pred_check
        %p222 = pneg %p221
      $region38: #{tpu_custom_call.1} parent=5 // pred_check_branch
        %224 = sbr.rel (%p222) target = $region40
      $region39: #{tpu_custom_call.1} parent=5 // pred_region
        %s225 = ssub.s32 %s14, 2
        // Predicated region
        $region41: #{tpu_custom_call.1} parent=39 // pred_check
          %p226 = pneg %p111
        $region42: #{tpu_custom_call.1} parent=39 // pred_check_branch
          %228 = sbr.rel (%p226) target = $region44
        $region43: #{tpu_custom_call.1} parent=39 // pred_region
          %s229 = sand.u32 %s96, 1
          %s230 = scalar_lea.sflag [#allocation4], %s229
          %s231 = sand.u32 %s96, 1
          %s232 = smul.addr %s231, 2
          %s233 = scalar_lea.vmem [#allocation5], %s232
          %234 = dma.done %s230, 32
        $region44: #{tpu_custom_call.1} parent=39 // pred_fallthru
          _
      $region40: #{tpu_custom_call.1} parent=5 // pred_fallthru
        _
    $region6: #{tpu_custom_call.1} parent=1 // loop_footer
      %s18 = sadd.s32 1, %s14
    $region7: #{tpu_custom_call.1} parent=1 // loop_footer_branch
      %13 = sbr.rel target = $region3
    $region8: #{tpu_custom_call.1} parent=1 // loop_exit
      _
    %235 = vsyncpa [#allocation3], 1
    %s236 = scalar_lea.sflag [#allocation3], 1
    %237 = vsyncpa %s236, 1
    %238 = vsyncpa [#allocation4], 1
    %s239 = scalar_lea.sflag [#allocation4], 1
    %240 = vsyncpa %s239, 1

</llo_original>
